<compile_context>
chip_gen: v7x
topology: tpu7x:2x2x1
jax: 0.10.0
libtpu: 0.0.40
codegen_flags: <defaults>
</compile_context>

<pallas_src>
import functools

import jax
import jax.numpy as jnp
from jax.experimental import pallas as pl
from jax.experimental.pallas import tpu as pltpu


LN_EPS = 1e-5  # matches torch.nn.LayerNorm default


def _v2a_mapper_kernel(x_ref, w1_ref, b1_ref, w2_ref, b2_ref, o_ref):
    """Fused forward: h = silu(x@W1+b1); h = LN(h); o = h@W2'+b2'.

    (LayerNorm affine is pre-folded into W2'/b2' by the wrapper.)
    """
    # --- Linear 1 (MXU, f32 accumulation) ---
    h = jnp.dot(x_ref[...], w1_ref[...], preferred_element_type=jnp.float32)
    h = h + b1_ref[...]

    # --- SiLU (sigmoid on the EUP) ---
    h = h * jax.nn.sigmoid(h)

    # --- LayerNorm over the expanded (lane) dim; affine already folded away ---
    mu = jnp.mean(h, axis=-1, keepdims=True)
    xc = h - mu
    var = jnp.mean(xc * xc, axis=-1, keepdims=True)
    hn = xc * jax.lax.rsqrt(var + LN_EPS)

    # --- Linear 2 (MXU, f32 accumulation) ---
    o = jnp.dot(hn.astype(w2_ref.dtype), w2_ref[...],
                preferred_element_type=jnp.float32)
    o_ref[...] = (o + b2_ref[...]).astype(o_ref.dtype)


@functools.partial(jax.jit, static_argnames=("block_b",))
def v2a_mapper_forward(x, w1, b1, gamma, beta, w2, b2, *, block_b=1024):
    """x: [B, input_dim] -> [B, output_dim]."""
    B, D_in = x.shape
    H = w1.shape[1]           # input_dim * expansion_rate
    D_out = w2.shape[1]

    # ---- Fold LayerNorm affine into the second linear (free, wrapper-time) ----
    w2_f = (gamma.astype(jnp.float32)[:, None]
            * w2.astype(jnp.float32)).astype(w2.dtype)
    b2_f = (beta.astype(jnp.float32) @ w2.astype(jnp.float32)
            + b2.astype(jnp.float32))

    # ---- Pick the batch tile ----
    bb = min(block_b, B)
    bb = max(8, (bb // 8) * 8)          # f32 sublane multiple
    if bb >= B and B >= 16:
        # Split into (at least) 2 grid steps so both TensorCores on a v7x chip
        # can be used via the "parallel" grid axis.
        bb = (((B + 1) // 2) + 7) // 8 * 8
    B_pad = -(-B // bb) * bb            # ceil(B / bb) * bb

    x_p = x if B_pad == B else jnp.pad(x, ((0, B_pad - B), (0, 0)))

    # 2-D views of biases so they tile cleanly as (1, H) / (1, D_out) blocks.
    b1_2d = b1.reshape(1, H)
    b2_2d = b2_f.reshape(1, D_out)

    grid = (B_pad // bb,)

    out = pl.pallas_call(
        _v2a_mapper_kernel,
        out_shape=jax.ShapeDtypeStruct((B_pad, D_out), x.dtype),
        grid_spec=pltpu.PrefetchScalarGridSpec(
            num_scalar_prefetch=0,
            grid=grid,
            in_specs=[
                pl.BlockSpec((bb, D_in), lambda i: (i, 0)),     # x tile (streams)
                pl.BlockSpec((D_in, H), lambda i: (0, 0)),      # W1 (resident)
                pl.BlockSpec((1, H), lambda i: (0, 0)),         # b1 (resident)
                pl.BlockSpec((H, D_out), lambda i: (0, 0)),     # W2' (resident)
                pl.BlockSpec((1, D_out), lambda i: (0, 0)),     # b2' (resident)
            ],
            out_specs=pl.BlockSpec((bb, D_out), lambda i: (i, 0)),
        ),
        compiler_params=pltpu.CompilerParams(
            dimension_semantics=("parallel",),
            vmem_limit_bytes=32 * 1024 * 1024,
        ),
    )(x_p, w1, b1_2d, w2_f, b2_2d)

    return out if B_pad == B else out[:B]


def _reference_forward(x, w1, b1, gamma, beta, w2, b2):
    h = x @ w1 + b1
    h = h * jax.nn.sigmoid(h)
    mu = jnp.mean(h, axis=-1, keepdims=True)
    var = jnp.mean((h - mu) ** 2, axis=-1, keepdims=True)
    hn = (h - mu) / jnp.sqrt(var + LN_EPS)
    hn = hn * gamma + beta
    return hn @ w2 + b2


if __name__ == "__main__":
    # Module config: V2AMapper(input_dim=32, output_dim=32, expansion_rate=4)
    input_dim = 32
    output_dim = 32
    expansion_rate = 4
    hidden = input_dim * expansion_rate  # 128 (== output_dim*expansion, as LayerNorm requires)

    key = jax.random.PRNGKey(0)
    k_x, k_x2, k_x3, k_w1, k_b1, k_w2, k_b2 = jax.random.split(key, 7)

    # Deterministic parameter init (synthetic; PyTorch-Linear-like scaling).
    # Weights stored as [in, out] (transposed vs torch's [out, in] layout).
    w1 = jax.random.uniform(k_w1, (input_dim, hidden), jnp.float32,
                            -1.0, 1.0) / jnp.sqrt(input_dim)
    b1 = jax.random.uniform(k_b1, (hidden,), jnp.float32,
                            -1.0, 1.0) / jnp.sqrt(input_dim)
    gamma = jnp.ones((hidden,), jnp.float32)   # LayerNorm weight init
    beta = jnp.zeros((hidden,), jnp.float32)   # LayerNorm bias init
    w2 = jax.random.uniform(k_w2, (hidden, output_dim), jnp.float32,
                            -1.0, 1.0) / jnp.sqrt(hidden)
    b2 = jax.random.uniform(k_b2, (output_dim,), jnp.float32,
                            -1.0, 1.0) / jnp.sqrt(hidden)

    # Case 1: small batch (single tile).
    B = 8
    x = jax.random.normal(k_x, (B, input_dim), dtype=jnp.float32)
    out = jax.block_until_ready(v2a_mapper_forward(x, w1, b1, gamma, beta, w2, b2))
    ref = _reference_forward(x, w1, b1, gamma, beta, w2, b2)
    assert out.shape == (B, output_dim)
    assert jnp.allclose(out, ref, atol=1e-4, rtol=1e-4), "mismatch vs JAX reference (B=8)"

    # Case 2: batch not a multiple of the tile -> exercises padding + 2-step grid.
    B2 = 20
    x2 = jax.random.normal(k_x2, (B2, input_dim), dtype=jnp.float32)
    out2 = jax.block_until_ready(v2a_mapper_forward(x2, w1, b1, gamma, beta, w2, b2))
    ref2 = _reference_forward(x2, w1, b1, gamma, beta, w2, b2)
    assert out2.shape == (B2, output_dim)
    assert jnp.allclose(out2, ref2, atol=1e-4, rtol=1e-4), "mismatch vs JAX reference (B=20)"

    # Case 3: batch that fits one tile but is split in two for megacore sharding.
    B3 = 256
    x3 = jax.random.normal(k_x3, (B3, input_dim), dtype=jnp.float32)
    out3 = jax.block_until_ready(v2a_mapper_forward(x3, w1, b1, gamma, beta, w2, b2))
    ref3 = _reference_forward(x3, w1, b1, gamma, beta, w2, b2)
    assert out3.shape == (B3, output_dim)
    assert jnp.allclose(out3, ref3, atol=1e-4, rtol=1e-4), "mismatch vs JAX reference (B=256)"

    print("KERNEL_OK")
</pallas_src>

<mosaic_0001>
module attributes {stable_mosaic.version = 11 : i64} {
  func.func @_v2a_mapper_kernel(%arg0: i32, %arg1: memref<8x32xf32, #tpu.memory_space<vmem>>, %arg2: memref<32x128xf32, #tpu.memory_space<vmem>>, %arg3: memref<1x128xf32, #tpu.memory_space<vmem>>, %arg4: memref<128x32xf32, #tpu.memory_space<vmem>>, %arg5: memref<1x32xf32, #tpu.memory_space<vmem>>, %arg6: memref<8x32xf32, #tpu.memory_space<vmem>>) attributes {dimension_semantics = [#tpu.dimension_semantics<parallel>], iteration_bounds = array<i64: 1>, scalar_prefetch = 0 : i64, scratch_operands = 0 : i64, tpu.core_type = #tpu.core_type<tc>, window_params = [{transform_indices = @transform_0, window_bounds = array<i64: 8, 32>}, {pipeline_mode = #tpu.pipeline_mode<synchronous>, transform_indices = @transform_1, window_bounds = array<i64: 32, 128>}, {pipeline_mode = #tpu.pipeline_mode<synchronous>, transform_indices = @transform_2, window_bounds = array<i64: 1, 128>}, {pipeline_mode = #tpu.pipeline_mode<synchronous>, transform_indices = @transform_3, window_bounds = array<i64: 128, 32>}, {pipeline_mode = #tpu.pipeline_mode<synchronous>, transform_indices = @transform_4, window_bounds = array<i64: 1, 32>}, {transform_indices = @transform_5, window_bounds = array<i64: 8, 32>}]} {
    %c0 = arith.constant 0 : index
    %c0_0 = arith.constant 0 : index
    %0 = vector.load %arg1[%c0, %c0_0] : memref<8x32xf32, #tpu.memory_space<vmem>>, vector<8x32xf32>
    %c0_1 = arith.constant 0 : index
    %c0_2 = arith.constant 0 : index
    %1 = vector.load %arg2[%c0_1, %c0_2] : memref<32x128xf32, #tpu.memory_space<vmem>>, vector<32x128xf32>
    %cst = arith.constant dense<0.000000e+00> : vector<8x128xf32>
    %2 = tpu.matmul %0, %1, %cst {dimension_numbers = #tpu.dot_dimension_numbers<[1], [0], [0], [1], [0, 0, 1, 1], [], []>} : vector<8x32xf32>, vector<32x128xf32>, vector<8x128xf32> -> vector<8x128xf32>
    %c0_3 = arith.constant 0 : index
    %c0_4 = arith.constant 0 : index
    %3 = vector.load %arg3[%c0_3, %c0_4] : memref<1x128xf32, #tpu.memory_space<vmem>>, vector<1x128xf32>
    %4 = vector.broadcast %3 : vector<1x128xf32> to vector<8x128xf32>
    %5 = arith.addf %2, %4 : vector<8x128xf32>
    %6 = arith.negf %5 : vector<8x128xf32>
    %7 = math.exp %6 : vector<8x128xf32>
    %cst_5 = arith.constant 1.000000e+00 : f32
    %8 = vector.broadcast %cst_5 : f32 to vector<8x128xf32>
    %9 = arith.addf %8, %7 : vector<8x128xf32>
    %10 = arith.divf %8, %9 : vector<8x128xf32>
    %11 = arith.mulf %5, %10 : vector<8x128xf32>
    %cst_6 = arith.constant dense<0.000000e+00> : vector<8xf32>
    %12 = vector.multi_reduction <add>, %11, %cst_6 [1] : vector<8x128xf32> to vector<8xf32>
    %13 = vector.shape_cast %12 : vector<8xf32> to vector<8x1xf32>
    %cst_7 = arith.constant 1.280000e+02 : f32
    %14 = vector.broadcast %cst_7 : f32 to vector<8x1xf32>
    %15 = arith.divf %13, %14 : vector<8x1xf32>
    %16 = vector.broadcast %15 : vector<8x1xf32> to vector<8x128xf32>
    %17 = arith.subf %11, %16 : vector<8x128xf32>
    %18 = arith.mulf %17, %17 : vector<8x128xf32>
    %cst_8 = arith.constant dense<0.000000e+00> : vector<8xf32>
    %19 = vector.multi_reduction <add>, %18, %cst_8 [1] : vector<8x128xf32> to vector<8xf32>
    %20 = vector.shape_cast %19 : vector<8xf32> to vector<8x1xf32>
    %cst_9 = arith.constant 1.280000e+02 : f32
    %21 = vector.broadcast %cst_9 : f32 to vector<8x1xf32>
    %22 = arith.divf %20, %21 : vector<8x1xf32>
    %cst_10 = arith.constant 9.99999974E-6 : f32
    %23 = vector.broadcast %cst_10 : f32 to vector<8x1xf32>
    %24 = arith.addf %22, %23 : vector<8x1xf32>
    %25 = math.rsqrt %24 : vector<8x1xf32>
    %26 = vector.broadcast %25 : vector<8x1xf32> to vector<8x128xf32>
    %27 = arith.mulf %17, %26 : vector<8x128xf32>
    %c0_11 = arith.constant 0 : index
    %c0_12 = arith.constant 0 : index
    %28 = vector.load %arg4[%c0_11, %c0_12] : memref<128x32xf32, #tpu.memory_space<vmem>>, vector<128x32xf32>
    %cst_13 = arith.constant dense<0.000000e+00> : vector<8x32xf32>
    %29 = tpu.matmul %27, %28, %cst_13 {dimension_numbers = #tpu.dot_dimension_numbers<[1], [0], [0], [1], [0, 0, 1, 1], [], []>} : vector<8x128xf32>, vector<128x32xf32>, vector<8x32xf32> -> vector<8x32xf32>
    %c0_14 = arith.constant 0 : index
    %c0_15 = arith.constant 0 : index
    %30 = vector.load %arg5[%c0_14, %c0_15] : memref<1x32xf32, #tpu.memory_space<vmem>>, vector<1x32xf32>
    %31 = vector.broadcast %30 : vector<1x32xf32> to vector<8x32xf32>
    %32 = arith.addf %29, %31 : vector<8x32xf32>
    %c0_16 = arith.constant 0 : index
    %c0_17 = arith.constant 0 : index
    %33 = vector.load %arg6[%c0_16, %c0_17] : memref<8x32xf32, #tpu.memory_space<vmem>>, vector<8x32xf32>
    tpu.vector_store %arg6[%c0_16, %c0_17], %32 {strides = array<i32>} : memref<8x32xf32, #tpu.memory_space<vmem>>, vector<8x32xf32>,
    return
  }
  func.func @transform_0(%arg0: i32) -> (i32, i32) {
    %c0_i32 = arith.constant 0 : i32
    %c0_i32_0 = arith.constant 0 : i32
    return %arg0, %c0_i32 : i32, i32
  }
  func.func @transform_1(%arg0: i32) -> (i32, i32) {
    %c0_i32 = arith.constant 0 : i32
    %c0_i32_0 = arith.constant 0 : i32
    %c0_i32_1 = arith.constant 0 : i32
    return %c0_i32, %c0_i32_0 : i32, i32
  }
  func.func @transform_2(%arg0: i32) -> (i32, i32) {
    %c0_i32 = arith.constant 0 : i32
    %c0_i32_0 = arith.constant 0 : i32
    %c0_i32_1 = arith.constant 0 : i32
    return %c0_i32, %c0_i32_0 : i32, i32
  }
  func.func @transform_3(%arg0: i32) -> (i32, i32) {
    %c0_i32 = arith.constant 0 : i32
    %c0_i32_0 = arith.constant 0 : i32
    %c0_i32_1 = arith.constant 0 : i32
    return %c0_i32, %c0_i32_0 : i32, i32
  }
  func.func @transform_4(%arg0: i32) -> (i32, i32) {
    %c0_i32 = arith.constant 0 : i32
    %c0_i32_0 = arith.constant 0 : i32
    %c0_i32_1 = arith.constant 0 : i32
    return %c0_i32, %c0_i32_0 : i32, i32
  }
  func.func @transform_5(%arg0: i32) -> (i32, i32) {
    %c0_i32 = arith.constant 0 : i32
    %c0_i32_0 = arith.constant 0 : i32
    return %arg0, %c0_i32 : i32, i32
  }
}

</mosaic_0001>

<llo_original>
// kernel: v2a_mapper_forward.1
$region0: #{v2a_mapper_forward.1}
  #allocation0 [shape = 'u32[]', space=smem, size = 0x4, offset = 0x4, fixed_abs, tag = 'smem constant byte address 0x4 - core index']
  #allocation1 [shape = 'u32[144,128]{1,0:T(1,128)}', space=vmem, size = 0x12000, scoped, tag = 'internal scratch']
  %s0 = inlined_call_operand.vmem [shape: f32[8,32], index: 0, kind: input, shape index: {}]
  %s1 = inlined_call_operand.vmem [shape: f32[32,128], index: 1, kind: input, shape index: {}]
  %s2 = inlined_call_operand.vmem [shape: f32[1,128], index: 2, kind: input, shape index: {}]
  %s3 = inlined_call_operand.vmem [shape: f32[128,32], index: 3, kind: input, shape index: {}]
  %s4 = inlined_call_operand.vmem [shape: f32[1,32], index: 4, kind: input, shape index: {}]
  %s5 = inlined_call_operand.hbm [shape: f32[8,32], index: 5, kind: output, shape index: {}]
  %s6 = sld [smem:[#allocation0]]
  $region30: #{v2a_mapper_forward.1} parent=0
    _
  %s8 = ssub.s32 1, %s6
  %s9 = scalar_select 0, %s8, %s6
  $region1: #{v2a_mapper_forward.1} parent=0
    #allocation2 [shape = 'u8[4096]{0}', space=vmem, size = 0x1000, scoped, tag = 'output window, operand 0, single buffered']
    #allocation3 [shape = 's32[1]{0}', space=sflag, size = 0x4, scoped, tag = 'scoped memory for v2a_mapper_forward.1']
    %10 = vsyncpa [#allocation3], 0
    // Predicated region
    $region2: #{v2a_mapper_forward.1} parent=1 // pred_check
      _
    $region3: #{v2a_mapper_forward.1} parent=1 // pred_check_branch
      %12 = sbr.rel (0) target = $region5
    $region4: #{v2a_mapper_forward.1} parent=1 // pred_region
      _
    $region5: #{v2a_mapper_forward.1} parent=1 // pred_fallthru
      _
    // Predicated region
    $region6: #{v2a_mapper_forward.1} parent=1 // pred_check
      _
    $region7: #{v2a_mapper_forward.1} parent=1 // pred_check_branch
      %14 = sbr.rel (0) target = $region9
    $region8: #{v2a_mapper_forward.1} parent=1 // pred_region
      _
    $region9: #{v2a_mapper_forward.1} parent=1 // pred_fallthru
      _
    // Predicated region
    $region10: #{v2a_mapper_forward.1} parent=1 // pred_check
      _
    $region11: #{v2a_mapper_forward.1} parent=1 // pred_check_branch
      %16 = sbr.rel (0) target = $region13
    $region12: #{v2a_mapper_forward.1} parent=1 // pred_region
      _
    $region13: #{v2a_mapper_forward.1} parent=1 // pred_fallthru
      _
    // Predicated region
    $region14: #{v2a_mapper_forward.1} parent=1 // pred_check
      _
    $region15: #{v2a_mapper_forward.1} parent=1 // pred_check_branch
      %18 = sbr.rel (0) target = $region17
    $region16: #{v2a_mapper_forward.1} parent=1 // pred_region
      _
    $region17: #{v2a_mapper_forward.1} parent=1 // pred_fallthru
      _
    // Predicated region
    $region18: #{v2a_mapper_forward.1} parent=1 // pred_check
      _
    $region19: #{v2a_mapper_forward.1} parent=1 // pred_check_branch
      %20 = sbr.rel (0) target = $region21
    $region20: #{v2a_mapper_forward.1} parent=1 // pred_region
      _
    $region21: #{v2a_mapper_forward.1} parent=1 // pred_fallthru
      _
    %v21 = vld [vmem:[%s0] sm:$0xff]
    %v22 = vld [vmem:[%s1] sm:$0xff]
    %v23 = vld [vmem:[%s1 + $0x8] sm:$0xff]
    %v24 = vld [vmem:[%s1 + $0x10] sm:$0xff]
    %v25 = vld [vmem:[%s1 + $0x18] sm:$0xff]
    %v26 = vld [vmem:[%s2] sm:$0x1]
    %v28 = vlaneseq
    %v29 = vshrl.u32 %v28, 7
    %v30 = vsub.s32 0, %v29
    %v31 = vrot.slane %v26, %v30
    %vm33 = vcmask 261120
    %v35 = vsel %vm33, %v21, 0
    %37 = vmatprep.subr.mxu0 0.0
    %38 = vmatpush1.msra.mxu0 %v22
    %39 = vmatprep.subr.mxu0 0.0
    %40 = vmatpush1.msra.mxu0 %v23
    %41 = vmatprep.subr.mxu0 0.0
    %42 = vmatpush1.msra.mxu0 %v24
    %43 = vmatprep.subr.mxu0 0.0
    %44 = vmatpush1.msra.mxu0 %v25
    %45 = vmatprep.subr.mxu0 0.0
    %46 = vmatpush1.msra.mxu0 0.0
    %47 = vmatprep.subr.mxu0 0.0
    %48 = vmatpush1.msra.mxu0 0.0
    %49 = vmatprep.subr.mxu0 0.0
    %50 = vmatpush1.msra.mxu0 0.0
    %51 = vmatprep.subr.mxu0 0.0
    %52 = vmatpush1.msra.mxu0 0.0
    %53 = vmatprep.subr.mxu0 0.0
    %54 = vmatpush1.msra.mxu0 0.0
    %55 = vmatprep.subr.mxu0 0.0
    %56 = vmatpush1.msra.mxu0 0.0
    %57 = vmatprep.subr.mxu0 0.0
    %58 = vmatpush1.msra.mxu0 0.0
    %59 = vmatprep.subr.mxu0 0.0
    %60 = vmatpush1.msra.mxu0 0.0
    %61 = vmatprep.subr.mxu0 0.0
    %62 = vmatpush1.msra.mxu0 0.0
    %63 = vmatprep.subr.mxu0 0.0
    %64 = vmatpush1.msra.mxu0 0.0
    %65 = vmatprep.subr.mxu0 0.0
    %66 = vmatpush1.msra.mxu0 0.0
    %67 = vmatprep.subr.mxu0 0.0
    %68 = vmatpush1.msra.mxu0 0.0
    %69 = vmatprep.subr.mxu0 0.0
    %70 = vmatpush1.msra.mxu0 0.0
    %71 = vmatprep.subr.mxu0 0.0
    %72 = vmatpush1.msra.mxu0 0.0
    %73 = vmatprep.subr.mxu0 0.0
    %74 = vmatpush1.msra.mxu0 0.0
    %75 = vmatprep.subr.mxu0 0.0
    %76 = vmatpush1.msra.mxu0 0.0
    %77 = vmatprep.subr.mxu0 0.0
    %78 = vmatpush1.msra.mxu0 0.0
    %79 = vmatprep.subr.mxu0 0.0
    %80 = vmatpush1.msra.mxu0 0.0
    %81 = vmatprep.subr.mxu0 0.0
    %82 = vmatpush1.msra.mxu0 0.0
    %83 = vmatprep.subr.mxu0 0.0
    %84 = vmatpush1.msra.mxu0 0.0
    %85 = vmatprep.subr.mxu0 0.0
    %86 = vmatpush1.msra.mxu0 0.0
    %87 = vmatprep.subr.mxu0 0.0
    %88 = vmatpush1.msra.mxu0 0.0
    %89 = vmatprep.subr.mxu0 0.0
    %90 = vmatpush1.msra.mxu0 0.0
    %91 = vmatprep.subr.mxu0 0.0
    %92 = vmatpush1.msra.mxu0 0.0
    %93 = vmatprep.subr.mxu0 0.0
    %94 = vmatpush1.msra.mxu0 0.0
    %95 = vmatprep.subr.mxu0 0.0
    %96 = vmatpush1.msra.mxu0 0.0
    %97 = vmatprep.subr.mxu0 0.0
    %98 = vmatpush1.msra.mxu0 0.0
    %99 = vmatprep.subr.mxu0 0.0
    %100 = vmatpush1.msra.mxu0 0.0
    %101 = vmatprep.mubr.f32.mxu0 0.0
    %102 = vmatmul.mubr.f32.gmra.mrb[0].mxu0 %v35
    %v103 = vpop.f32.mrb[0].mxu0
    %v104 = vadd.f32 %v31, %v103
    %v105 = vpop.f32.mrb[0].mxu0
    %106 = vdwg.mxu0
    %v107 = vxor.u32 %v104, 2147483648
    %v108 = vmul.f32 %v107, 1.442695
    %v109 = vpow.pop %v108
    %v110 = vadd.f32 %v109, 1.0
    %v111 = vrcp.pop %v110
    %v112 = vmul.f32 1.0, %v111
    %v113 = vmul.f32 %v104, %v112
    %114 = vadd.xlane.f32.xlu0 %v113
    %v115 = vpop.xlane.xlu0 %114
    %v116 = vrcp.pop 128.0
    %v117 = vmul.f32 %v115, %v116
    %v118 = vsub.f32 %v113, %v117
    %v119 = vmul.f32 %v118, %v118
    %120 = vadd.xlane.f32.xlu0 %v119
    %v121 = vpop.xlane.xlu0 %120
    %v122 = vmul.f32 %v121, %v116
    %v123 = vadd.f32 %v122, 1e-05
    %v124 = vrsqrt.pop %v123
    %v125 = vmul.f32 %v118, %v124
    %v126 = vld [vmem:[%s3] sm:$0xff]
    %v127 = vld [vmem:[%s3 + $0x8] sm:$0xff]
    %v128 = vld [vmem:[%s3 + $0x10] sm:$0xff]
    %v129 = vld [vmem:[%s3 + $0x18] sm:$0xff]
    %v130 = vld [vmem:[%s3 + $0x20] sm:$0xff]
    %v131 = vld [vmem:[%s3 + $0x28] sm:$0xff]
    %v132 = vld [vmem:[%s3 + $0x30] sm:$0xff]
    %v133 = vld [vmem:[%s3 + $0x38] sm:$0xff]
    %v134 = vld [vmem:[%s3 + $0x40] sm:$0xff]
    %v135 = vld [vmem:[%s3 + $0x48] sm:$0xff]
    %v136 = vld [vmem:[%s3 + $0x50] sm:$0xff]
    %v137 = vld [vmem:[%s3 + $0x58] sm:$0xff]
    %v138 = vld [vmem:[%s3 + $0x60] sm:$0xff]
    %v139 = vld [vmem:[%s3 + $0x68] sm:$0xff]
    %v140 = vld [vmem:[%s3 + $0x70] sm:$0xff]
    %v141 = vld [vmem:[%s3 + $0x78] sm:$0xff]
    %v142 = vld [vmem:[%s4] sm:$0x1]
    %v144 = vlaneseq
    %v145 = vshrl.u32 %v144, 7
    %v146 = vsub.s32 0, %v145
    %v147 = vrot.slane %v142, %v146
    %149 = vmatprep.subr.mxu0 0.0
    %150 = vmatpush1.msra.mxu0 %v126
    %151 = vmatprep.subr.mxu0 0.0
    %152 = vmatpush1.msra.mxu0 %v127
    %153 = vmatprep.subr.mxu0 0.0
    %154 = vmatpush1.msra.mxu0 %v128
    %155 = vmatprep.subr.mxu0 0.0
    %156 = vmatpush1.msra.mxu0 %v129
    %157 = vmatprep.subr.mxu0 0.0
    %158 = vmatpush1.msra.mxu0 %v130
    %159 = vmatprep.subr.mxu0 0.0
    %160 = vmatpush1.msra.mxu0 %v131
    %161 = vmatprep.subr.mxu0 0.0
    %162 = vmatpush1.msra.mxu0 %v132
    %163 = vmatprep.subr.mxu0 0.0
    %164 = vmatpush1.msra.mxu0 %v133
    %165 = vmatprep.subr.mxu0 0.0
    %166 = vmatpush1.msra.mxu0 %v134
    %167 = vmatprep.subr.mxu0 0.0
    %168 = vmatpush1.msra.mxu0 %v135
    %169 = vmatprep.subr.mxu0 0.0
    %170 = vmatpush1.msra.mxu0 %v136
    %171 = vmatprep.subr.mxu0 0.0
    %172 = vmatpush1.msra.mxu0 %v137
    %173 = vmatprep.subr.mxu0 0.0
    %174 = vmatpush1.msra.mxu0 %v138
    %175 = vmatprep.subr.mxu0 0.0
    %176 = vmatpush1.msra.mxu0 %v139
    %177 = vmatprep.subr.mxu0 0.0
    %178 = vmatpush1.msra.mxu0 %v140
    %179 = vmatprep.subr.mxu0 0.0
    %180 = vmatpush1.msra.mxu0 %v141
    %181 = vmatprep.subr.mxu0 0.0
    %182 = vmatpush1.msra.mxu0 0.0
    %183 = vmatprep.subr.mxu0 0.0
    %184 = vmatpush1.msra.mxu0 0.0
    %185 = vmatprep.subr.mxu0 0.0
    %186 = vmatpush1.msra.mxu0 0.0
    %187 = vmatprep.subr.mxu0 0.0
    %188 = vmatpush1.msra.mxu0 0.0
    %189 = vmatprep.subr.mxu0 0.0
    %190 = vmatpush1.msra.mxu0 0.0
    %191 = vmatprep.subr.mxu0 0.0
    %192 = vmatpush1.msra.mxu0 0.0
    %193 = vmatprep.subr.mxu0 0.0
    %194 = vmatpush1.msra.mxu0 0.0
    %195 = vmatprep.subr.mxu0 0.0
    %196 = vmatpush1.msra.mxu0 0.0
    %197 = vmatprep.subr.mxu0 0.0
    %198 = vmatpush1.msra.mxu0 0.0
    %199 = vmatprep.subr.mxu0 0.0
    %200 = vmatpush1.msra.mxu0 0.0
    %201 = vmatprep.subr.mxu0 0.0
    %202 = vmatpush1.msra.mxu0 0.0
    %203 = vmatprep.subr.mxu0 0.0
    %204 = vmatpush1.msra.mxu0 0.0
    %205 = vmatprep.subr.mxu0 0.0
    %206 = vmatpush1.msra.mxu0 0.0
    %207 = vmatprep.subr.mxu0 0.0
    %208 = vmatpush1.msra.mxu0 0.0
    %209 = vmatprep.subr.mxu0 0.0
    %210 = vmatpush1.msra.mxu0 0.0
    %211 = vmatprep.subr.mxu0 0.0
    %212 = vmatpush1.msra.mxu0 0.0
    %213 = vmatprep.mubr.f32.mxu0 0.0
    %214 = vmatmul.mubr.f32.gmra.mrb[0].mxu0 %v125
    %v215 = vpop.f32.mrb[0].mxu0
    %v216 = vadd.f32 %v147, %v215
    %v217 = vpop.f32.mrb[0].mxu0
    %218 = vdwg.mxu0
    %219 = vst.msk [vmem:[#allocation2] sm:$0xff] %vm33, %v216
    // Predicated region
    $region22: #{v2a_mapper_forward.1} parent=1 // pred_check
      _
    $region23: #{v2a_mapper_forward.1} parent=1 // pred_check_branch
      %221 = sbr.rel (0) target = $region25
    $region24: #{v2a_mapper_forward.1} parent=1 // pred_region
      %s223 = ssub.s32 128, 128
      %224 = vsyncadd [#allocation3], %s223
      %s226 = sshll.u32 [#allocation2], 4
      %s227 = int_to_ptr.vmem [resolvable:$true] %s226
      %229 = dma.vmem_to_hbm [thread:$0]  %s227, 128, %s5, [#allocation3]
    $region25: #{v2a_mapper_forward.1} parent=1 // pred_fallthru
      _
    // Predicated region
    $region26: #{v2a_mapper_forward.1} parent=1 // pred_check
      _
    $region27: #{v2a_mapper_forward.1} parent=1 // pred_check_branch
      %231 = sbr.rel (0) target = $region29
    $region28: #{v2a_mapper_forward.1} parent=1 // pred_region
      %232 = dma.done [#allocation3], 128
    $region29: #{v2a_mapper_forward.1} parent=1 // pred_fallthru
      _
    %233 = vsyncpa [#allocation3], 1

</llo_original>
